<compile_context>
chip_gen: v7x
topology: tpu7x:2x2x1
jax: 0.10.0
libtpu: 0.0.40
codegen_flags: <defaults>
</compile_context>

<pallas_src>
import functools

import jax
import jax.numpy as jnp
from jax.experimental import pallas as pl
from jax.experimental.pallas import tpu as pltpu


_NEG = -1e30  # padding value for padded classes/rows: exp(_NEG - max) underflows to 0


def _round_up(x, m):
    return (x + m - 1) // m * m


def _focal_loss_kernel(logits_ref, targets_ref, alpha_ref, out_ref, *,
                       gamma, size_average, n_true, tile_n):
    i = pl.program_id(0)
    n_blocks = pl.num_programs(0)

    @pl.when(i == 0)
    def _init():
        out_ref[0, 0] = jnp.float32(0.0)

    x = logits_ref[...].astype(jnp.float32)   # (tile_n, c_pad), upcast in-kernel
    t = targets_ref[...]                      # (tile_n, 1) int32 class ids
    a = alpha_ref[...]                        # (1, c_pad) f32 per-class alpha

    # One-hot class mask via iota compare (equivalent of scatter_(1, targets, 1)).
    col = jax.lax.broadcasted_iota(jnp.int32, x.shape, dimension=1)
    class_mask = (col == t).astype(jnp.float32)              # (tile_n, c_pad)

    # log-prob of the true class via log-sum-exp (no full softmax materialized).
    m = jnp.max(x, axis=-1, keepdims=True)                   # (tile_n, 1)
    s = jnp.sum(jnp.exp(x - m), axis=-1, keepdims=True)      # (tile_n, 1)
    x_true = jnp.sum(x * class_mask, axis=-1, keepdims=True) # (tile_n, 1)
    log_p = x_true - m - jnp.log(s)                          # (tile_n, 1)
    probs = jnp.exp(log_p)                                   # (tile_n, 1)

    # alpha_n = alpha[targets[i]]
    alpha_n = jnp.sum(class_mask * a, axis=-1, keepdims=True)

    # (1 - p)^gamma: plain multiplies for small integer gamma (no exp/log round-trip).
    u = 1.0 - probs
    g = float(gamma)
    if g == int(g) and 0 <= int(g) <= 8:
        focal = jnp.ones_like(u)
        for _ in range(int(g)):
            focal = focal * u
    else:
        focal = jnp.power(u, jnp.float32(g))

    per_row = -alpha_n * focal * log_p                       # (tile_n, 1)

    # Mask rows of the (possibly partial) last tile that are past the true N.
    row = jax.lax.broadcasted_iota(jnp.int32, per_row.shape, dimension=0)
    valid = (i * tile_n + row) < n_true
    per_row = jnp.where(valid, per_row, 0.0)

    out_ref[0, 0] += jnp.sum(per_row)

    @pl.when(i == n_blocks - 1)
    def _finalize():
        if size_average:
            out_ref[0, 0] = out_ref[0, 0] / jnp.float32(n_true)


def focal_loss(logits, targets, alpha=None, gamma=2.0, size_average=True,
               tile_n=None):
    """Pallas TPU focal loss. logits: (N, C) float/bf16, targets: (N,) int."""
    N, C = logits.shape
    c_pad = _round_up(C, 128)                 # lane-dense class axis
    itemsize = jnp.dtype(logits.dtype).itemsize

    if tile_n is None:
        # Size the batch tile so one double-buffered logits block stays ~<= 8 MiB
        # (safe on v5e/v6e/v7x scoped-VMEM defaults), capped at 1024 rows.
        budget = 8 * 1024 * 1024
        max_rows = max(8, budget // (2 * c_pad * itemsize))
        tile_n = min(1024, int(max_rows), _round_up(N, 8))
        tile_n = max(8, (tile_n // 8) * 8)
    else:
        tile_n = max(8, _round_up(int(tile_n), 8))
    n_pad = _round_up(N, tile_n)
    grid = (n_pad // tile_n,)

    # NOTE: keep the HBM dtype of `logits` (e.g. bf16); upcast happens in-kernel.
    logits_p = jnp.pad(logits, ((0, n_pad - N), (0, c_pad - C)),
                       constant_values=jnp.asarray(_NEG, logits.dtype))
    targets_p = jnp.pad(jnp.asarray(targets, jnp.int32).reshape(N, 1),
                        ((0, n_pad - N), (0, 0)))
    if alpha is None:
        alpha = jnp.ones((C,), dtype=jnp.float32)   # matches torch.ones(class_num, 1)
    alpha_p = jnp.pad(jnp.asarray(alpha, jnp.float32).reshape(1, C),
                      ((0, 0), (0, c_pad - C)))

    kernel = functools.partial(_focal_loss_kernel,
                               gamma=float(gamma),
                               size_average=bool(size_average),
                               n_true=int(N),
                               tile_n=int(tile_n))

    block_bytes = tile_n * c_pad * itemsize
    vmem_limit = int(min(max(6 * block_bytes + (1 << 20), 16 << 20), 64 << 20))

    out = pl.pallas_call(
        kernel,
        out_shape=jax.ShapeDtypeStruct((1, 1), jnp.float32),
        grid=grid,
        in_specs=[
            pl.BlockSpec((tile_n, c_pad), lambda i: (i, 0)),   # logits tile
            pl.BlockSpec((tile_n, 1), lambda i: (i, 0)),       # targets tile
            pl.BlockSpec((1, c_pad), lambda i: (0, 0)),        # alpha (resident)
        ],
        out_specs=pl.BlockSpec(memory_space=pltpu.MemorySpace.SMEM),
        compiler_params=pltpu.CompilerParams(
            dimension_semantics=("arbitrary",),   # reduction axis (accumulator)
            vmem_limit_bytes=vmem_limit),
    )(logits_p, targets_p, alpha_p)
    return out[0, 0]


def _focal_loss_ref(logits, targets, alpha, gamma=2.0, size_average=True):
    """Pure-JAX reference for correctness checking."""
    P = jax.nn.softmax(logits.astype(jnp.float32), axis=1)
    mask = jax.nn.one_hot(targets, logits.shape[1], dtype=jnp.float32)
    probs = jnp.sum(P * mask, axis=1)
    alpha_n = jnp.asarray(alpha, jnp.float32)[targets]
    batch_loss = -alpha_n * jnp.power(1.0 - probs, gamma) * jnp.log(probs)
    return jnp.mean(batch_loss) if size_average else jnp.sum(batch_loss)


if __name__ == "__main__":
    # Case 1: small canonical shapes (batch=8, classes=32), size_average=True.
    N, C = 8, 32
    gamma = 2.0

    key = jax.random.PRNGKey(0)
    k1, k2, k3 = jax.random.split(key, 3)
    logits = jax.random.normal(k1, (N, C), dtype=jnp.float32)
    targets = jax.random.randint(k2, (N,), 0, C, dtype=jnp.int32)
    alpha = jnp.ones((C,), dtype=jnp.float32)   # default alpha=None -> ones(class_num, 1)

    loss = focal_loss(logits, targets, alpha=alpha, gamma=gamma, size_average=True)
    loss = jax.block_until_ready(loss)
    ref = _focal_loss_ref(logits, targets, alpha, gamma=gamma, size_average=True)
    assert jnp.allclose(loss, ref, rtol=1e-4, atol=1e-6), (loss, ref)

    # Case 2: ragged shapes exercising class padding, multi-step grid and the
    # partial last tile, non-uniform alpha, size_average=False.
    N2, C2 = 37, 45
    logits2 = jax.random.normal(k3, (N2, C2), dtype=jnp.float32) * 3.0
    targets2 = jax.random.randint(k2, (N2,), 0, C2, dtype=jnp.int32)
    alpha2 = jax.random.uniform(k1, (C2,), dtype=jnp.float32, minval=0.25, maxval=2.0)
    loss2 = jax.block_until_ready(
        focal_loss(logits2, targets2, alpha=alpha2, gamma=gamma,
                   size_average=False, tile_n=16))
    ref2 = _focal_loss_ref(logits2, targets2, alpha2, gamma=gamma, size_average=False)
    assert jnp.allclose(loss2, ref2, rtol=1e-4, atol=1e-5), (loss2, ref2)

    print("KERNEL_OK")
</pallas_src>

<mosaic_0001>
module attributes {stable_mosaic.version = 11 : i64} {
  func.func @_focal_loss_kernel(%arg0: i32, %arg1: memref<8x128xf32, #tpu.memory_space<vmem>>, %arg2: memref<8x1xi32, #tpu.memory_space<vmem>>, %arg3: memref<1x128xf32, #tpu.memory_space<vmem>>, %arg4: memref<1x1xf32, #tpu.memory_space<smem>>) attributes {dimension_semantics = [#tpu.dimension_semantics<arbitrary>], iteration_bounds = array<i64: 1>, scalar_prefetch = 0 : i64, scratch_operands = 0 : i64, tpu.core_type = #tpu.core_type<tc>, window_params = [{transform_indices = @transform_0, window_bounds = array<i64: 8, 128>}, {transform_indices = @transform_1, window_bounds = array<i64: 8, 1>}, {pipeline_mode = #tpu.pipeline_mode<synchronous>, transform_indices = @transform_2, window_bounds = array<i64: 1, 128>}, {transform_indices = @transform_3, window_bounds = array<i64: 1, 1>}]} {
    %c0_i32 = arith.constant 0 : i32
    %0 = arith.cmpi eq, %arg0, %c0_i32 : i32
    %1 = arith.extui %0 : i1 to i32
    %c0_i32_0 = arith.constant 0 : i32
    %2 = arith.cmpi ne, %1, %c0_i32_0 : i32
    scf.if %2 {
      %cst_21 = arith.constant 0.000000e+00 : f32
      %c0_22 = arith.constant 0 : index
      %c0_23 = arith.constant 0 : index
      %56 = memref.load %arg4[%c0_22, %c0_23] : memref<1x1xf32, #tpu.memory_space<smem>>
      memref.store %cst_21, %arg4[%c0_22, %c0_23] : memref<1x1xf32, #tpu.memory_space<smem>>
    } else {
    }
    %c0 = arith.constant 0 : index
    %c0_1 = arith.constant 0 : index
    %3 = vector.load %arg1[%c0, %c0_1] : memref<8x128xf32, #tpu.memory_space<vmem>>, vector<8x128xf32>
    %c0_2 = arith.constant 0 : index
    %c0_3 = arith.constant 0 : index
    %4 = vector.load %arg2[%c0_2, %c0_3] : memref<8x1xi32, #tpu.memory_space<vmem>>, vector<8x1xi32>
    %c0_4 = arith.constant 0 : index
    %c0_5 = arith.constant 0 : index
    %5 = vector.load %arg3[%c0_4, %c0_5] : memref<1x128xf32, #tpu.memory_space<vmem>>, vector<1x128xf32>
    %6 = tpu.iota {dimensions = array<i32: 1>} : vector<8x128xi32>
    %7 = vector.broadcast %4 : vector<8x1xi32> to vector<8x128xi32>
    %8 = arith.cmpi eq, %6, %7 : vector<8x128xi32>
    %9 = arith.extui %8 : vector<8x128xi1> to vector<8x128xi32>
    %10 = arith.sitofp %9 : vector<8x128xi32> to vector<8x128xf32>
    %cst = arith.constant dense<0xFF800000> : vector<8xf32>
    %11 = vector.multi_reduction <maximumf>, %3, %cst [1] : vector<8x128xf32> to vector<8xf32>
    %12 = vector.shape_cast %11 : vector<8xf32> to vector<8x1xf32>
    %13 = vector.broadcast %12 : vector<8x1xf32> to vector<8x128xf32>
    %14 = arith.subf %3, %13 : vector<8x128xf32>
    %15 = math.exp %14 : vector<8x128xf32>
    %cst_6 = arith.constant dense<0.000000e+00> : vector<8xf32>
    %16 = vector.multi_reduction <add>, %15, %cst_6 [1] : vector<8x128xf32> to vector<8xf32>
    %17 = vector.shape_cast %16 : vector<8xf32> to vector<8x1xf32>
    %18 = arith.mulf %3, %10 : vector<8x128xf32>
    %cst_7 = arith.constant dense<0.000000e+00> : vector<8xf32>
    %19 = vector.multi_reduction <add>, %18, %cst_7 [1] : vector<8x128xf32> to vector<8xf32>
    %20 = vector.shape_cast %19 : vector<8xf32> to vector<8x1xf32>
    %21 = arith.subf %20, %12 : vector<8x1xf32>
    %22 = math.log %17 : vector<8x1xf32>
    %23 = arith.subf %21, %22 : vector<8x1xf32>
    %24 = math.exp %23 : vector<8x1xf32>
    %25 = vector.broadcast %5 : vector<1x128xf32> to vector<8x128xf32>
    %26 = arith.mulf %10, %25 : vector<8x128xf32>
    %cst_8 = arith.constant dense<0.000000e+00> : vector<8xf32>
    %27 = vector.multi_reduction <add>, %26, %cst_8 [1] : vector<8x128xf32> to vector<8xf32>
    %28 = vector.shape_cast %27 : vector<8xf32> to vector<8x1xf32>
    %cst_9 = arith.constant 1.000000e+00 : f32
    %29 = vector.broadcast %cst_9 : f32 to vector<8x1xf32>
    %30 = arith.subf %29, %24 : vector<8x1xf32>
    %cst_10 = arith.constant 1.000000e+00 : f32
    %31 = vector.broadcast %cst_10 : f32 to vector<8x1xf32>
    %32 = arith.mulf %31, %30 : vector<8x1xf32>
    %33 = arith.mulf %32, %30 : vector<8x1xf32>
    %cst_11 = arith.constant 0.000000e+00 : f32
    %34 = vector.broadcast %cst_11 : f32 to vector<8x1xf32>
    %35 = arith.subf %34, %28 : vector<8x1xf32>
    %36 = arith.mulf %35, %33 : vector<8x1xf32>
    %37 = arith.mulf %36, %23 : vector<8x1xf32>
    %38 = tpu.iota {dimensions = array<i32: 0>} : vector<8x1xi32>
    %c8_i32 = arith.constant 8 : i32
    %39 = arith.muli %arg0, %c8_i32 : i32
    %40 = vector.broadcast %39 : i32 to vector<8x1xi32>
    %41 = arith.addi %40, %38 : vector<8x1xi32>
    %c8_i32_12 = arith.constant 8 : i32
    %42 = vector.broadcast %c8_i32_12 : i32 to vector<8x1xi32>
    %43 = arith.cmpi slt, %41, %42 : vector<8x1xi32>
    %cst_13 = arith.constant 0.000000e+00 : f32
    %44 = vector.broadcast %cst_13 : f32 to vector<8x1xf32>
    %45 = arith.select %43, %37, %44 : vector<8x1xi1>, vector<8x1xf32>
    %c0_14 = arith.constant 0 : index
    %c0_15 = arith.constant 0 : index
    %46 = memref.load %arg4[%c0_14, %c0_15] : memref<1x1xf32, #tpu.memory_space<smem>>
    %47 = vector.shape_cast %45 : vector<8x1xf32> to vector<1x8x1xf32>
    %cst_16 = arith.constant dense<0.000000e+00> : vector<1xf32>
    %48 = vector.multi_reduction <add>, %47, %cst_16 [1, 2] : vector<1x8x1xf32> to vector<1xf32>
    %49 = vector.shape_cast %48 : vector<1xf32> to vector<1x1x1xf32>
    %50 = vector.extract %49[0, 0, 0] : f32 from vector<1x1x1xf32>
    %51 = arith.addf %46, %50 : f32
    %c0_17 = arith.constant 0 : index
    %c0_18 = arith.constant 0 : index
    %52 = memref.load %arg4[%c0_17, %c0_18] : memref<1x1xf32, #tpu.memory_space<smem>>
    memref.store %51, %arg4[%c0_17, %c0_18] : memref<1x1xf32, #tpu.memory_space<smem>>
    %c0_i32_19 = arith.constant 0 : i32
    %53 = arith.cmpi eq, %arg0, %c0_i32_19 : i32
    %54 = arith.extui %53 : i1 to i32
    %c0_i32_20 = arith.constant 0 : i32
    %55 = arith.cmpi ne, %54, %c0_i32_20 : i32
    scf.if %55 {
      %c0_21 = arith.constant 0 : index
      %c0_22 = arith.constant 0 : index
      %56 = memref.load %arg4[%c0_21, %c0_22] : memref<1x1xf32, #tpu.memory_space<smem>>
      %cst_23 = arith.constant 8.000000e+00 : f32
      %57 = arith.divf %56, %cst_23 : f32
      %c0_24 = arith.constant 0 : index
      %c0_25 = arith.constant 0 : index
      %58 = memref.load %arg4[%c0_24, %c0_25] : memref<1x1xf32, #tpu.memory_space<smem>>
      memref.store %57, %arg4[%c0_24, %c0_25] : memref<1x1xf32, #tpu.memory_space<smem>>
    } else {
    }
    return
  }
  func.func @transform_0(%arg0: i32) -> (i32, i32) {
    %c0_i32 = arith.constant 0 : i32
    %c0_i32_0 = arith.constant 0 : i32
    return %arg0, %c0_i32 : i32, i32
  }
  func.func @transform_1(%arg0: i32) -> (i32, i32) {
    %c0_i32 = arith.constant 0 : i32
    %c0_i32_0 = arith.constant 0 : i32
    return %arg0, %c0_i32 : i32, i32
  }
  func.func @transform_2(%arg0: i32) -> (i32, i32) {
    %c0_i32 = arith.constant 0 : i32
    %c0_i32_0 = arith.constant 0 : i32
    %c0_i32_1 = arith.constant 0 : i32
    return %c0_i32, %c0_i32_0 : i32, i32
  }
  func.func @transform_3(%arg0: i32) -> (i32, i32) {
    %c0_i32 = arith.constant 0 : i32
    %c0_i32_0 = arith.constant 0 : i32
    %c0_i32_1 = arith.constant 0 : i32
    return %c0_i32, %c0_i32_0 : i32, i32
  }
}

</mosaic_0001>

<llo_original>
// kernel: tpu_custom_call.1
$region0: #{tpu_custom_call.1}
  #allocation0 [shape = 'u32[]', space=smem, size = 0x4, offset = 0x4, fixed_abs, tag = 'smem constant byte address 0x4 - core index']
  #allocation1 [shape = 'u32[144,128]{1,0:T(1,128)}', space=vmem, size = 0x12000, scoped, tag = 'internal scratch']
  %s0 = inlined_call_operand.vmem [shape: f32[8,128], index: 0, kind: input, shape index: {}]
  %s1 = inlined_call_operand.vmem [shape: s32[8,1], index: 1, kind: input, shape index: {}]
  %s2 = inlined_call_operand.vmem [shape: f32[1,128], index: 2, kind: input, shape index: {}]
  %s3 = inlined_call_operand.hbm [shape: f32[1,1], index: 3, kind: output, shape index: {}]
  %s4 = sld [smem:[#allocation0]]
  $region30: #{tpu_custom_call.1} parent=0
    _
  %s6 = ssub.s32 1, %s4
  %s7 = scalar_select 0, %s6, %s4
  $region1: #{tpu_custom_call.1} parent=0
    #allocation2 [shape = 'u8[512]{0}', space=smem, size = 0x200, scoped, tag = 'output window, operand 0, single buffered']
    #allocation3 [shape = 's32[1]{0}', space=sflag, size = 0x4, scoped, tag = 'scoped memory for tpu_custom_call.1']
    %8 = vsyncpa [#allocation3], 0
    // Predicated region
    $region2: #{tpu_custom_call.1} parent=1 // pred_check
      _
    $region3: #{tpu_custom_call.1} parent=1 // pred_check_branch
      %10 = sbr.rel (0) target = $region5
    $region4: #{tpu_custom_call.1} parent=1 // pred_region
      _
    $region5: #{tpu_custom_call.1} parent=1 // pred_fallthru
      _
    // Predicated region
    $region6: #{tpu_custom_call.1} parent=1 // pred_check
      _
    $region7: #{tpu_custom_call.1} parent=1 // pred_check_branch
      %12 = sbr.rel (0) target = $region9
    $region8: #{tpu_custom_call.1} parent=1 // pred_region
      _
    $region9: #{tpu_custom_call.1} parent=1 // pred_fallthru
      _
    // Predicated region
    $region10: #{tpu_custom_call.1} parent=1 // pred_check
      _
    $region11: #{tpu_custom_call.1} parent=1 // pred_check_branch
      %14 = sbr.rel (0) target = $region13
    $region12: #{tpu_custom_call.1} parent=1 // pred_region
      _
    $region13: #{tpu_custom_call.1} parent=1 // pred_fallthru
      _
    %p15 = scmp.eq.s32.totalorder 0, 0
    // Predicated region
    $region14: #{tpu_custom_call.1} parent=1 // pred_check
      %p16 = pneg %p15
    $region15: #{tpu_custom_call.1} parent=1 // pred_check_branch
      %18 = sbr.rel (%p16) target = $region17
    $region16: #{tpu_custom_call.1} parent=1 // pred_region
      %s19 = scalar_lea.smem [#allocation2], 0
      %20 = sst [smem:[%s19]] 0.0
    $region17: #{tpu_custom_call.1} parent=1 // pred_fallthru
      _
    %v21 = vld [vmem:[%s0] sm:$0xff]
    %v22 = vld [vmem:[%s1] sm:$0xff]
    %v23 = vld [vmem:[%s2] sm:$0x1]
    %v24 = vlaneseq
    %v25 = vand.u32 %v24, 127
    %26 = vset.pattern.permute.xlu0 0
    %27 = vperm.xlu0 %26, %v22
    %v28 = vpop.permute.xlu0 %27
    %vm29 = vcmp.eq.s32.totalorder %v25, %v28
    %v30 = vsel %vm29, 1, 0
    %v31 = vcvt.s32.f32 %v30
    %32 = vmax.xlane.f32.xlu0 %v21
    %v33 = vpop.xlane.xlu0 %32
    %v34 = vsub.f32 %v21, %v33
    %v35 = vmul.f32 %v34, 1.442695
    %v36 = vpow.pop %v35
    %37 = vadd.xlane.f32.xlu0 %v36
    %v38 = vpop.xlane.xlu0 %37
    %v39 = vmul.f32 %v21, %v31
    %40 = vadd.xlane.f32.xlu0 %v39
    %v41 = vpop.xlane.xlu0 %40
    %v42 = vsub.f32 %v41, %v33
    %v43 = vlog2.pop %v38
    %v44 = vmul.f32 %v43, 0.6931472
    %v45 = vsub.f32 %v42, %v44
    %v46 = vmul.f32 %v45, 1.442695
    %v47 = vpow.pop %v46
    %v49 = vlaneseq
    %v50 = vshrl.u32 %v49, 7
    %v51 = vsub.s32 0, %v50
    %v52 = vrot.slane %v23, %v51
    %v54 = vmul.f32 %v31, %v52
    %55 = vadd.xlane.f32.xlu0 %v54
    %v56 = vpop.xlane.xlu0 %55
    %v57 = vsub.f32 1.0, %v47
    %v58 = vmul.f32 %v57, %v57
    %v59 = vsub.f32 0.0, %v56
    %v60 = vmul.f32 %v59, %v58
    %v61 = vmul.f32 %v60, %v45
    %v62 = vlaneseq
    %v63 = vshrl.u32 %v62, 7
    %s64 = smul.u32 0, 8
    %v65 = vstv %s64
    %v66 = vadd.s32 %v65, %v63
    %vm67 = vcmp.lt.s32.totalorder %v66, 8
    %v68 = vsel %vm67, %v61, 0.0
    %s69 = sld [smem:[#allocation2]]
    %vm70 = vcmask 7168
    %v71 = vsel %vm70, %v68, 0.0
    %72 = vadd.xlane.f32.xlu0 %v71
    %v73 = vpop.xlane.xlu0 %72
    %v74 = vrot.slane %v73, 4
    %v75 = vadd.f32 %v73, %v74
    %v76 = vrot.slane %v75, 2
    %v77 = vadd.f32 %v75, %v76
    %v78 = vrot.slane %v77, 1
    %v79 = vadd.f32 %v77, %v78
    %s80 = vtos %v79
    %s81 = sadd.f32 %s69, %s80
    %s82 = scalar_lea.smem [#allocation2], 0
    %83 = sst [smem:[%s82]] %s81
    // Predicated region
    $region18: #{tpu_custom_call.1} parent=1 // pred_check
      %p84 = pneg %p15
    $region19: #{tpu_custom_call.1} parent=1 // pred_check_branch
      %86 = sbr.rel (%p84) target = $region21
    $region20: #{tpu_custom_call.1} parent=1 // pred_region
      %s87 = sld [smem:[#allocation2]]
      %v88 = vrcp.pop 8.0
      %s89 = vtos %v88
      %s90 = smul.f32 %s87, %s89
      %91 = sst [smem:[%s82]] %s90
    $region21: #{tpu_custom_call.1} parent=1 // pred_fallthru
      _
    // Predicated region
    $region22: #{tpu_custom_call.1} parent=1 // pred_check
      _
    $region23: #{tpu_custom_call.1} parent=1 // pred_check_branch
      %93 = sbr.rel (0) target = $region25
    $region24: #{tpu_custom_call.1} parent=1 // pred_region
      %s95 = ssub.s32 16, 16
      %96 = vsyncadd [#allocation3], %s95
      %99 = dma.smem_to_hbm [#allocation2], 16, %s3, [#allocation3]
    $region25: #{tpu_custom_call.1} parent=1 // pred_fallthru
      _
    // Predicated region
    $region26: #{tpu_custom_call.1} parent=1 // pred_check
      _
    $region27: #{tpu_custom_call.1} parent=1 // pred_check_branch
      %101 = sbr.rel (0) target = $region29
    $region28: #{tpu_custom_call.1} parent=1 // pred_region
      %102 = dma.done [#allocation3], 16
    $region29: #{tpu_custom_call.1} parent=1 // pred_fallthru
      _
    %103 = sfence
    %104 = vsyncpa [#allocation3], 1

</llo_original>
